<compile_context>
chip_gen: v7x
topology: tpu7x:2x2x1
jax: 0.10.0
libtpu: 0.0.40
codegen_flags: <defaults>
</compile_context>

<pallas_src>
import math
import numpy as np
import jax
import jax.numpy as jnp
from jax.experimental import pallas as pl
from jax.experimental.pallas import tpu as pltpu


KPAD = 128    # im2col contraction dim: Cin*9 = 90 -> 128
C1_PAD = 128  # conv1 output channels:  20 -> 128
C2_PAD = 128  # conv2 output channels:  20 -> 128 (lane-dense, unmasked vst)


def _sigmoid(x):
    # numerically stable sigmoid with the divide pushed onto the EUP:
    #   x >= 0: 1/(1+e^-x),  x < 0: e^x/(1+e^x), with e = exp(-|x|) in (0, 1].
    e = jnp.exp(-jnp.abs(x))
    r = pl.reciprocal(1.0 + e, approx=True)
    return jnp.where(x >= 0.0, r, e * r)


def _conv_sigmoid_kernel(xcol_ref, w1_ref, b1_ref, w2_ref, b2_ref, y_ref):
    # conv1 as im2col matmul: (TM, 128) @ (128, 128), bf16 operands / f32 accumulate
    v1 = jnp.dot(xcol_ref[...], w1_ref[...], preferred_element_type=jnp.float32)
    v2 = _sigmoid(v1 + b1_ref[...])
    # conv2 (1x1) as channel matmul at every sampled position: (TM, 128) @ (128, 128)
    v3 = jnp.dot(v2.astype(jnp.bfloat16), w2_ref[...],
                 preferred_element_type=jnp.float32)
    # bf16 store: halves the dominant HBM writeback; values are in (0, 1)
    y_ref[...] = _sigmoid(v3 + b2_ref[...]).astype(y_ref.dtype)


def _round_up(a, b):
    return -(-a // b) * b


def _pad_to(arr, shape):
    pads = [(0, t - s) for s, t in zip(arr.shape, shape)]
    return jnp.pad(arr, pads)


def _choose_tm(rows):
    # Big tiles amortize the ~0.35us/step grid overhead; keep >= 2 grid steps when
    # possible so the "parallel" row axis can shard across v7x's 2 TensorCores.
    # Multiples of 16 match bf16 sublane packing. At TM=2048 the double-buffered
    # working set is ~3 MiB — far below scoped VMEM on v5e/v6e/v7x.
    rows_aligned = _round_up(max(rows, 16), 16)
    if rows_aligned >= 32:
        tm = _round_up(-(-rows_aligned // 2), 16)
    else:
        tm = rows_aligned
    return int(min(2048, tm))


def _run_pallas(xcol_bf, w1_bf, b1row, w2_bf, b2row, tm):
    rows_p, kcols = xcol_bf.shape
    c1 = w1_bf.shape[1]
    c2p = w2_bf.shape[1]
    return pl.pallas_call(
        _conv_sigmoid_kernel,
        out_shape=jax.ShapeDtypeStruct((rows_p, c2p), jnp.bfloat16),
        grid=(rows_p // tm,),
        in_specs=[
            pl.BlockSpec((tm, kcols), lambda i: (i, 0)),   # xcol tile (pipelined)
            pl.BlockSpec((kcols, c1), lambda i: (0, 0)),   # w1 padded (resident)
            pl.BlockSpec((1, c1), lambda i: (0, 0)),       # b1 padded (resident)
            pl.BlockSpec((c1, c2p), lambda i: (0, 0)),     # w2 padded (resident)
            pl.BlockSpec((1, c2p), lambda i: (0, 0)),      # b2 padded (resident)
        ],
        out_specs=pl.BlockSpec((tm, c2p), lambda i: (i, 0)),
        compiler_params=pltpu.CompilerParams(
            dimension_semantics=("parallel",),
        ),
    )(xcol_bf, w1_bf, b1row, w2_bf, b2row)


def model_forward(x, w1, b1, w2, b2):
    """x: (N, Cin, H, W) float32 NCHW, H and W even. Returns (N, C2, Ho, Wo) NCHW."""
    N, Cin, H, W = x.shape
    C1 = w1.shape[0]
    C2 = w2.shape[0]
    assert H % 2 == 0 and W % 2 == 0, "even spatial dims assumed (as in the spec)"
    Hi, Wi = H // 2, W // 2          # interior (non-border) conv2 output grid
    Ho, Wo = Hi + 1, Wi + 1          # full conv2 output (row/col 0 from zero pad)

    # --- glue: im2col ONLY for the stride-2-surviving positions, built in bf16 ---
    # conv2 output (i,j) with i,j>=1 reads conv1 output at (2i-1, 2j-1); conv1 at
    # position p reads padded-x rows p..p+2 -> padded rows 2*oi+1+kh, oi=0..Hi-1.
    xb = x.astype(jnp.bfloat16)
    xp = jnp.pad(xb, ((0, 0), (0, 0), (1, 1), (1, 1)))
    views = [xp[:, :, 1 + kh:H + kh:2, 1 + kw:W + kw:2]
             for kh in range(3) for kw in range(3)]
    patches = jnp.stack(views, axis=2)                       # (N, Cin, 9, Hi, Wi)
    xcol = patches.transpose(0, 3, 4, 1, 2).reshape(N * Hi * Wi, Cin * 9)

    # --- weights (glue): im2col column index = ci*9 + kh*3 + kw; pad to 128 -----
    w1mat = jnp.transpose(w1, (1, 2, 3, 0)).reshape(Cin * 9, C1)
    w1p = _pad_to(w1mat, (KPAD, C1_PAD)).astype(jnp.bfloat16)
    b1p = _pad_to(b1.reshape(1, C1).astype(jnp.float32), (1, C1_PAD))
    w2mat = w2[:, :, 0, 0].T                                  # (C1, C2)
    w2p = _pad_to(w2mat, (C1_PAD, C2_PAD)).astype(jnp.bfloat16)
    b2p = _pad_to(b2.reshape(1, C2).astype(jnp.float32), (1, C2_PAD))
    # note: padded C1 channels become sigmoid(0)=0.5 in v2 but hit zero w2 rows, so
    # they contribute nothing; padded C2 channels hold 0.5 garbage and are sliced off.

    # --- row tiling ------------------------------------------------------------
    rows = N * Hi * Wi
    TM = _choose_tm(rows)
    rows_p = _round_up(rows, TM)
    xcol_p = _pad_to(xcol, (rows_p, KPAD))

    # --- hot path: matmuls + bias + sigmoids in the Pallas kernel ---------------
    y = _run_pallas(xcol_p, w1p, b1p, w2p, b2p, TM)           # (rows_p, 128) bf16
    y = y[:rows, :C2].reshape(N, Hi, Wi, C2).astype(jnp.float32)

    # --- glue: assemble border (zero-padded conv2 positions -> sigmoid(b2)) -----
    border = jax.nn.sigmoid(b2).astype(jnp.float32)           # (C2,)
    out = jnp.broadcast_to(border.reshape(1, 1, 1, C2), (N, Ho, Wo, C2))
    out = out.at[:, 1:, 1:, :].set(y)
    return out.transpose(0, 3, 1, 2)                          # back to NCHW


def reference_forward(x, w1, b1, w2, b2):
    v1 = jax.lax.conv_general_dilated(
        x, w1, window_strides=(1, 1), padding=((1, 1), (1, 1)),
        dimension_numbers=("NCHW", "OIHW", "NCHW"),
    ) + b1[None, :, None, None]
    v2 = jax.nn.sigmoid(v1)
    v3 = jax.lax.conv_general_dilated(
        v2, w2, window_strides=(2, 2), padding=((1, 1), (1, 1)),
        dimension_numbers=("NCHW", "OIHW", "NCHW"),
    ) + b2[None, :, None, None]
    return jax.nn.sigmoid(v3)


if __name__ == "__main__":
    key = jax.random.PRNGKey(0)
    kx, k1, k2, k3, k4 = jax.random.split(key, 5)

    # small shape consistent with the module's fixed channel counts (10 -> 20 -> 20)
    N, Cin, H, W = 2, 10, 16, 16
    C1, C2 = 20, 20

    x = jax.random.normal(kx, (N, Cin, H, W), dtype=jnp.float32)

    # deterministic PyTorch-style (uniform +/- 1/sqrt(fan_in)) parameter init
    bnd1 = 1.0 / math.sqrt(Cin * 3 * 3)
    w1 = jax.random.uniform(k1, (C1, Cin, 3, 3), jnp.float32, -bnd1, bnd1)
    b1 = jax.random.uniform(k2, (C1,), jnp.float32, -bnd1, bnd1)
    bnd2 = 1.0 / math.sqrt(C1 * 1 * 1)
    w2 = jax.random.uniform(k3, (C2, C1, 1, 1), jnp.float32, -bnd2, bnd2)
    b2 = jax.random.uniform(k4, (C2,), jnp.float32, -bnd2, bnd2)

    out = jax.block_until_ready(model_forward(x, w1, b1, w2, b2))
    ref = jax.block_until_ready(reference_forward(x, w1, b1, w2, b2))

    Ho = (H + 2 - 1) // 2 + 1
    Wo = (W + 2 - 1) // 2 + 1
    assert out.shape == (N, C2, Ho, Wo), out.shape
    # bf16 MXU operands + bf16 output store -> compare at bf16-level tolerance
    np.testing.assert_allclose(np.asarray(out), np.asarray(ref), atol=2e-2, rtol=2e-2)

    print("KERNEL_OK")
</pallas_src>

<mosaic_0001>
module attributes {stable_mosaic.version = 11 : i64} {
  func.func @_conv_sigmoid_kernel(%arg0: i32, %arg1: memref<64x128xbf16, #tpu.memory_space<vmem>>, %arg2: memref<128x128xbf16, #tpu.memory_space<vmem>>, %arg3: memref<1x128xf32, #tpu.memory_space<vmem>>, %arg4: memref<128x128xbf16, #tpu.memory_space<vmem>>, %arg5: memref<1x128xf32, #tpu.memory_space<vmem>>, %arg6: memref<64x128xbf16, #tpu.memory_space<vmem>>) attributes {dimension_semantics = [#tpu.dimension_semantics<parallel>], iteration_bounds = array<i64: 2>, scalar_prefetch = 0 : i64, scratch_operands = 0 : i64, tpu.core_type = #tpu.core_type<tc>, window_params = [{transform_indices = @transform_0, window_bounds = array<i64: 64, 128>}, {pipeline_mode = #tpu.pipeline_mode<synchronous>, transform_indices = @transform_1, window_bounds = array<i64: 128, 128>}, {pipeline_mode = #tpu.pipeline_mode<synchronous>, transform_indices = @transform_2, window_bounds = array<i64: 1, 128>}, {pipeline_mode = #tpu.pipeline_mode<synchronous>, transform_indices = @transform_3, window_bounds = array<i64: 128, 128>}, {pipeline_mode = #tpu.pipeline_mode<synchronous>, transform_indices = @transform_4, window_bounds = array<i64: 1, 128>}, {transform_indices = @transform_5, window_bounds = array<i64: 64, 128>}]} {
    %c0 = arith.constant 0 : index
    %c0_0 = arith.constant 0 : index
    %0 = vector.load %arg1[%c0, %c0_0] : memref<64x128xbf16, #tpu.memory_space<vmem>>, vector<64x128xbf16>
    %c0_1 = arith.constant 0 : index
    %c0_2 = arith.constant 0 : index
    %1 = vector.load %arg2[%c0_1, %c0_2] : memref<128x128xbf16, #tpu.memory_space<vmem>>, vector<128x128xbf16>
    %cst = arith.constant dense<0.000000e+00> : vector<64x128xf32>
    %2 = tpu.matmul %0, %1, %cst {dimension_numbers = #tpu.dot_dimension_numbers<[1], [0], [0], [1], [0, 0, 1, 1], [], []>} : vector<64x128xbf16>, vector<128x128xbf16>, vector<64x128xf32> -> vector<64x128xf32>
    %c0_3 = arith.constant 0 : index
    %c0_4 = arith.constant 0 : index
    %3 = vector.load %arg3[%c0_3, %c0_4] : memref<1x128xf32, #tpu.memory_space<vmem>>, vector<1x128xf32>
    %4 = vector.broadcast %3 : vector<1x128xf32> to vector<64x128xf32>
    %5 = arith.addf %2, %4 : vector<64x128xf32>
    %6 = math.absf %5 : vector<64x128xf32>
    %cst_5 = arith.constant 0.000000e+00 : f32
    %7 = vector.broadcast %cst_5 : f32 to vector<64x128xf32>
    %8 = arith.subf %7, %6 : vector<64x128xf32>
    %9 = math.exp %8 : vector<64x128xf32>
    %cst_6 = arith.constant 1.000000e+00 : f32
    %10 = vector.broadcast %cst_6 : f32 to vector<64x128xf32>
    %11 = arith.addf %10, %9 : vector<64x128xf32>
    %12 = tpu.reciprocal %11 {approx = true} : vector<64x128xf32> -> vector<64x128xf32>
    %cst_7 = arith.constant 0.000000e+00 : f32
    %13 = vector.broadcast %cst_7 : f32 to vector<64x128xf32>
    %14 = arith.cmpf oge, %5, %13 : vector<64x128xf32>
    %15 = arith.mulf %9, %12 : vector<64x128xf32>
    %16 = arith.select %14, %12, %15 : vector<64x128xi1>, vector<64x128xf32>
    %17 = arith.truncf %16 : vector<64x128xf32> to vector<64x128xbf16>
    %c0_8 = arith.constant 0 : index
    %c0_9 = arith.constant 0 : index
    %18 = vector.load %arg4[%c0_8, %c0_9] : memref<128x128xbf16, #tpu.memory_space<vmem>>, vector<128x128xbf16>
    %cst_10 = arith.constant dense<0.000000e+00> : vector<64x128xf32>
    %19 = tpu.matmul %17, %18, %cst_10 {dimension_numbers = #tpu.dot_dimension_numbers<[1], [0], [0], [1], [0, 0, 1, 1], [], []>} : vector<64x128xbf16>, vector<128x128xbf16>, vector<64x128xf32> -> vector<64x128xf32>
    %c0_11 = arith.constant 0 : index
    %c0_12 = arith.constant 0 : index
    %20 = vector.load %arg5[%c0_11, %c0_12] : memref<1x128xf32, #tpu.memory_space<vmem>>, vector<1x128xf32>
    %21 = vector.broadcast %20 : vector<1x128xf32> to vector<64x128xf32>
    %22 = arith.addf %19, %21 : vector<64x128xf32>
    %23 = math.absf %22 : vector<64x128xf32>
    %cst_13 = arith.constant 0.000000e+00 : f32
    %24 = vector.broadcast %cst_13 : f32 to vector<64x128xf32>
    %25 = arith.subf %24, %23 : vector<64x128xf32>
    %26 = math.exp %25 : vector<64x128xf32>
    %cst_14 = arith.constant 1.000000e+00 : f32
    %27 = vector.broadcast %cst_14 : f32 to vector<64x128xf32>
    %28 = arith.addf %27, %26 : vector<64x128xf32>
    %29 = tpu.reciprocal %28 {approx = true} : vector<64x128xf32> -> vector<64x128xf32>
    %cst_15 = arith.constant 0.000000e+00 : f32
    %30 = vector.broadcast %cst_15 : f32 to vector<64x128xf32>
    %31 = arith.cmpf oge, %22, %30 : vector<64x128xf32>
    %32 = arith.mulf %26, %29 : vector<64x128xf32>
    %33 = arith.select %31, %29, %32 : vector<64x128xi1>, vector<64x128xf32>
    %34 = arith.truncf %33 : vector<64x128xf32> to vector<64x128xbf16>
    %c0_16 = arith.constant 0 : index
    %c0_17 = arith.constant 0 : index
    %35 = vector.load %arg6[%c0_16, %c0_17] : memref<64x128xbf16, #tpu.memory_space<vmem>>, vector<64x128xbf16>
    tpu.vector_store %arg6[%c0_16, %c0_17], %34 {strides = array<i32>} : memref<64x128xbf16, #tpu.memory_space<vmem>>, vector<64x128xbf16>,
    return
  }
  func.func @transform_0(%arg0: i32) -> (i32, i32) {
    %c0_i32 = arith.constant 0 : i32
    %c0_i32_0 = arith.constant 0 : i32
    return %arg0, %c0_i32 : i32, i32
  }
  func.func @transform_1(%arg0: i32) -> (i32, i32) {
    %c0_i32 = arith.constant 0 : i32
    %c0_i32_0 = arith.constant 0 : i32
    %c0_i32_1 = arith.constant 0 : i32
    return %c0_i32, %c0_i32_0 : i32, i32
  }
  func.func @transform_2(%arg0: i32) -> (i32, i32) {
    %c0_i32 = arith.constant 0 : i32
    %c0_i32_0 = arith.constant 0 : i32
    %c0_i32_1 = arith.constant 0 : i32
    return %c0_i32, %c0_i32_0 : i32, i32
  }
  func.func @transform_3(%arg0: i32) -> (i32, i32) {
    %c0_i32 = arith.constant 0 : i32
    %c0_i32_0 = arith.constant 0 : i32
    %c0_i32_1 = arith.constant 0 : i32
    return %c0_i32, %c0_i32_0 : i32, i32
  }
  func.func @transform_4(%arg0: i32) -> (i32, i32) {
    %c0_i32 = arith.constant 0 : i32
    %c0_i32_0 = arith.constant 0 : i32
    %c0_i32_1 = arith.constant 0 : i32
    return %c0_i32, %c0_i32_0 : i32, i32
  }
  func.func @transform_5(%arg0: i32) -> (i32, i32) {
    %c0_i32 = arith.constant 0 : i32
    %c0_i32_0 = arith.constant 0 : i32
    return %arg0, %c0_i32 : i32, i32
  }
}

</mosaic_0001>

<llo_original>
// kernel: tpu_custom_call.1
$region0: #{tpu_custom_call.1}
  #allocation0 [shape = 'u32[]', space=smem, size = 0x4, offset = 0x4, fixed_abs, tag = 'smem constant byte address 0x4 - core index']
  #allocation1 [shape = 'u32[144,128]{1,0:T(1,128)}', space=vmem, size = 0x12000, scoped, tag = 'internal scratch']
  %s0 = inlined_call_operand.hbm [shape: bf16[128,128], index: 0, kind: input, shape index: {}]
  %s1 = inlined_call_operand.hbm [shape: bf16[128,128], index: 1, kind: input, shape index: {}]
  %s2 = inlined_call_operand.vmem [shape: f32[1,128], index: 2, kind: input, shape index: {}]
  %s3 = inlined_call_operand.hbm [shape: bf16[128,128], index: 3, kind: input, shape index: {}]
  %s4 = inlined_call_operand.vmem [shape: f32[1,128], index: 4, kind: input, shape index: {}]
  %s5 = inlined_call_operand.hbm [shape: bf16[128,128], index: 5, kind: output, shape index: {}]
  %s6 = sld [smem:[#allocation0]]
  $region65: #{tpu_custom_call.1} parent=0
    _
  %s8 = ssub.s32 1, %s6
  %s9 = scalar_select 0, %s8, %s6
  $region1: #{tpu_custom_call.1} parent=0
    #allocation2 [shape = 'u8[32768]{0}', space=vmem, size = 0x8000, scoped, tag = 'input window, operand 0']
    #allocation3 [shape = 's32[2]{0}', space=sflag, size = 0x8, scoped, tag = 'scoped memory for tpu_custom_call.1']
    #allocation4 [shape = 's32[2]{0}', space=sflag, size = 0x8, scoped, tag = 'scoped memory for tpu_custom_call.1']
    #allocation5 [shape = 'u8[32768]{0}', space=vmem, size = 0x8000, scoped, tag = 'input window, operand 1, single buffered']
    #allocation6 [shape = 's32[1]{0}', space=sflag, size = 0x4, scoped, tag = 'scoped memory for tpu_custom_call.1']
    #allocation7 [shape = 'u8[32768]{0}', space=vmem, size = 0x8000, scoped, tag = 'input window, operand 3, single buffered']
    #allocation8 [shape = 'u8[32768]{0}', space=vmem, size = 0x8000, scoped, tag = 'output window, operand 0']
    %10 = vsyncpa [#allocation3], 0
    %s11 = scalar_lea.sflag [#allocation3], 1
    %12 = vsyncpa %s11, 0
    %13 = vsyncpa [#allocation6], 0
    %14 = vsyncpa [#allocation4], 0
    %s15 = scalar_lea.sflag [#allocation4], 1
    %16 = vsyncpa %s15, 0
    loop: start=0, step=1, limit=4
    $region2: #{tpu_custom_call.1} parent=1 // loop_pre_header
      _
    $region3: #{tpu_custom_call.1} parent=1 // loop_header
      %s18 = sphi 0, %s22
      %p19 = scmp.ge.s32.totalorder %s18, 4
      %s28 = sphi 0, %s30
      %s31 = sphi 0, %s28
      %s32 = sphi 0, %s31
      %s48 = sphi 0, %s32
      %s52 = sphi 0, %s52
      %s54 = sphi 0, %s52
      %s55 = sphi 0, %s54
      %s69 = sphi 0, %s55
      %s73 = sphi 0, %s73
      %s75 = sphi 0, %s73
      %s76 = sphi 0, %s75
      %s90 = sphi 0, %s76
      %s94 = sphi 0, %s94
      %s96 = sphi 0, %s94
      %s97 = sphi 0, %s96
      %s111 = sphi 0, %s97
      %s115 = sphi 0, %s115
      %s117 = sphi 0, %s115
      %s118 = sphi 0, %s117
      %s132 = sphi 0, %s118
      %s138 = sphi 0, %s140
      %s141 = sphi 0, %s138
      %s142 = sphi 0, %s141
      %s158 = sphi 0, %s142
    $region4: #{tpu_custom_call.1} parent=1 // loop_header_branch
      %21 = sbr.rel (%p19) target = $region8
    $region5: #{tpu_custom_call.1} parent=1 // loop_body
      %s23 = ssub.s32 %s18, 1
      %s24 = ssub.s32 %s18, 2
      %s25 = sadd.s32 %s18, 1
      %s26 = ssub.s32 %s18, %s25
      %p27 = scmp.eq.s32.totalorder %s26, 0
      %s29 = sadd.s32 %s28, 1
      %s30 = scalar_select %p27, %s28, %s29
      %p33 = pneg %p27
      %p34 = scmp.eq.s32.totalorder %s18, 1
      %p35 = por %p33, %p34
      %p36 = scmp.ne.s32.totalorder %s28, %s31
      %p37 = scmp.eq.s32.totalorder %s18, 0
      %p38 = por %p36, %p37
      %p39 = scmp.ne.s32.totalorder %s28, %s31
      %p40 = scmp.eq.s32.totalorder %s23, 1
      %p41 = por %p39, %p40
      %p42 = scmp.ne.s32.totalorder %s31, %s32
      %p43 = scmp.eq.s32.totalorder %s23, 0
      %p44 = por %p42, %p43
      %p45 = scmp.ne.s32.totalorder %s31, %s32
      %p46 = scmp.eq.s32.totalorder %s24, 1
      %p47 = por %p45, %p46
      %p49 = scmp.ne.s32.totalorder %s32, %s48
      %p50 = scmp.eq.s32.totalorder %s24, 0
      %p51 = por %p49, %p50
      %s53 = sadd.s32 %s52, 1
      %p56 = scmp.eq.s32.totalorder %s18, 1
      %p57 = scmp.ne.s32.totalorder %s52, %s54
      %p58 = scmp.eq.s32.totalorder %s18, 0
      %p59 = por %p57, %p58
      %p60 = scmp.ne.s32.totalorder %s52, %s54
      %p61 = scmp.eq.s32.totalorder %s23, 1
      %p62 = por %p60, %p61
      %p63 = scmp.ne.s32.totalorder %s54, %s55
      %p64 = scmp.eq.s32.totalorder %s23, 0
      %p65 = por %p63, %p64
      %p66 = scmp.ne.s32.totalorder %s54, %s55
      %p67 = scmp.eq.s32.totalorder %s24, 1
      %p68 = por %p66, %p67
      %p70 = scmp.ne.s32.totalorder %s55, %s69
      %p71 = scmp.eq.s32.totalorder %s24, 0
      %p72 = por %p70, %p71
      %s74 = sadd.s32 %s73, 1
      %p77 = scmp.eq.s32.totalorder %s18, 1
      %p78 = scmp.ne.s32.totalorder %s73, %s75
      %p79 = scmp.eq.s32.totalorder %s18, 0
      %p80 = por %p78, %p79
      %p81 = scmp.ne.s32.totalorder %s73, %s75
      %p82 = scmp.eq.s32.totalorder %s23, 1
      %p83 = por %p81, %p82
      %p84 = scmp.ne.s32.totalorder %s75, %s76
      %p85 = scmp.eq.s32.totalorder %s23, 0
      %p86 = por %p84, %p85
      %p87 = scmp.ne.s32.totalorder %s75, %s76
      %p88 = scmp.eq.s32.totalorder %s24, 1
      %p89 = por %p87, %p88
      %p91 = scmp.ne.s32.totalorder %s76, %s90
      %p92 = scmp.eq.s32.totalorder %s24, 0
      %p93 = por %p91, %p92
      %s95 = sadd.s32 %s94, 1
      %p98 = scmp.eq.s32.totalorder %s18, 1
      %p99 = scmp.ne.s32.totalorder %s94, %s96
      %p100 = scmp.eq.s32.totalorder %s18, 0
      %p101 = por %p99, %p100
      %p102 = scmp.ne.s32.totalorder %s94, %s96
      %p103 = scmp.eq.s32.totalorder %s23, 1
      %p104 = por %p102, %p103
      %p105 = scmp.ne.s32.totalorder %s96, %s97
      %p106 = scmp.eq.s32.totalorder %s23, 0
      %p107 = por %p105, %p106
      %p108 = scmp.ne.s32.totalorder %s96, %s97
      %p109 = scmp.eq.s32.totalorder %s24, 1
      %p110 = por %p108, %p109
      %p112 = scmp.ne.s32.totalorder %s97, %s111
      %p113 = scmp.eq.s32.totalorder %s24, 0
      %p114 = por %p112, %p113
      %s116 = sadd.s32 %s115, 1
      %p119 = scmp.eq.s32.totalorder %s18, 1
      %p120 = scmp.ne.s32.totalorder %s115, %s117
      %p121 = scmp.eq.s32.totalorder %s18, 0
      %p122 = por %p120, %p121
      %p123 = scmp.ne.s32.totalorder %s115, %s117
      %p124 = scmp.eq.s32.totalorder %s23, 1
      %p125 = por %p123, %p124
      %p126 = scmp.ne.s32.totalorder %s117, %s118
      %p127 = scmp.eq.s32.totalorder %s23, 0
      %p128 = por %p126, %p127
      %p129 = scmp.ne.s32.totalorder %s117, %s118
      %p130 = scmp.eq.s32.totalorder %s24, 1
      %p131 = por %p129, %p130
      %p133 = scmp.ne.s32.totalorder %s118, %s132
      %p134 = scmp.eq.s32.totalorder %s24, 0
      %p135 = por %p133, %p134
      %s136 = ssub.s32 %s18, %s25
      %p137 = scmp.eq.s32.totalorder %s136, 0
      %s139 = sadd.s32 %s138, 1
      %s140 = scalar_select %p137, %s138, %s139
      %p143 = pneg %p137
      %p144 = scmp.eq.s32.totalorder %s18, 1
      %p145 = por %p143, %p144
      %p146 = scmp.ne.s32.totalorder %s138, %s141
      %p147 = scmp.eq.s32.totalorder %s18, 0
      %p148 = por %p146, %p147
      %p149 = scmp.ne.s32.totalorder %s138, %s141
      %p150 = scmp.eq.s32.totalorder %s23, 1
      %p151 = por %p149, %p150
      %p152 = scmp.ne.s32.totalorder %s141, %s142
      %p153 = scmp.eq.s32.totalorder %s23, 0
      %p154 = por %p152, %p153
      %p155 = scmp.ne.s32.totalorder %s141, %s142
      %p156 = scmp.eq.s32.totalorder %s24, 1
      %p157 = por %p155, %p156
      %p159 = scmp.ne.s32.totalorder %s142, %s158
      %p160 = scmp.eq.s32.totalorder %s24, 0
      %p161 = por %p159, %p160
      %p162 = scmp.le.s32.totalorder 1, %s18
      %p163 = scmp.lt.s32.totalorder %s18, 3
      %p164 = pnand %p162, %p163
      %p165 = pneg %p164
      // Predicated region
      $region9: #{tpu_custom_call.1} parent=5 // pred_check
        _
      $region10: #{tpu_custom_call.1} parent=5 // pred_check_branch
        %167 = sbr.rel (%p164) target = $region12
      $region11: #{tpu_custom_call.1} parent=5 // pred_region
        %s168 = ssub.s32 %s18, 1
        // Predicated region
        $region13: #{tpu_custom_call.1} parent=11 // pred_check
          %p169 = pneg %p65
        $region14: #{tpu_custom_call.1} parent=11 // pred_check_branch
          %171 = sbr.rel (%p169) target = $region16
        $region15: #{tpu_custom_call.1} parent=11 // pred_region
          %s173 = ssub.s32 1024, 1024
          %174 = vsyncadd [#allocation6], %s173
          %s175 = sshll.u32 [#allocation5], 4
          %s176 = int_to_ptr.vmem [resolvable:$true] %s175
          %181 = dma.hbm_to_vmem [thread:$0]  %s1, 1024, %s176, [#allocation6], 64, 64, 4
        $region16: #{tpu_custom_call.1} parent=11 // pred_fallthru
          _
        // Predicated region
        $region17: #{tpu_custom_call.1} parent=11 // pred_check
          %p182 = pneg %p86
        $region18: #{tpu_custom_call.1} parent=11 // pred_check_branch
          %184 = sbr.rel (%p182) target = $region20
        $region19: #{tpu_custom_call.1} parent=11 // pred_region
          _
        $region20: #{tpu_custom_call.1} parent=11 // pred_fallthru
          _
        // Predicated region
        $region21: #{tpu_custom_call.1} parent=11 // pred_check
          %p185 = pneg %p107
        $region22: #{tpu_custom_call.1} parent=11 // pred_check_branch
          %187 = sbr.rel (%p185) target = $region24
        $region23: #{tpu_custom_call.1} parent=11 // pred_region
          %s189 = ssub.s32 1024, 1024
          %190 = vsyncadd [#allocation6], %s189
          %s191 = sshll.u32 [#allocation7], 4
          %s192 = int_to_ptr.vmem [resolvable:$true] %s191
          %197 = dma.hbm_to_vmem [thread:$0]  %s3, 1024, %s192, [#allocation6], 64, 64, 4
        $region24: #{tpu_custom_call.1} parent=11 // pred_fallthru
          _
        // Predicated region
        $region25: #{tpu_custom_call.1} parent=11 // pred_check
          %p198 = pneg %p128
        $region26: #{tpu_custom_call.1} parent=11 // pred_check_branch
          %200 = sbr.rel (%p198) target = $region28
        $region27: #{tpu_custom_call.1} parent=11 // pred_region
          _
        $region28: #{tpu_custom_call.1} parent=11 // pred_fallthru
          _
      $region12: #{tpu_custom_call.1} parent=5 // pred_fallthru
        _
      %p201 = scmp.lt.s32.totalorder %s18, 2
      // Predicated region
      $region29: #{tpu_custom_call.1} parent=5 // pred_check
        %p202 = pneg %p201
      $region30: #{tpu_custom_call.1} parent=5 // pred_check_branch
        %204 = sbr.rel (%p202) target = $region32
      $region31: #{tpu_custom_call.1} parent=5 // pred_region
        // Predicated region
        $region33: #{tpu_custom_call.1} parent=31 // pred_check
          %p205 = pneg %p38
        $region34: #{tpu_custom_call.1} parent=31 // pred_check_branch
          %207 = sbr.rel (%p205) target = $region36
        $region35: #{tpu_custom_call.1} parent=31 // pred_region
          %s208 = sand.u32 %s28, 1
          %s209 = scalar_lea.sflag [#allocation3], %s208
          %s210 = sand.u32 %s28, 1
          %s211 = smul.addr %s210, 32
          %s212 = scalar_lea.vmem [#allocation2], %s211
          %s213 = smul.u32 8, %s18
          %s215 = ssub.s32 512, 512
          %216 = vsyncadd %s209, %s215
          %s217 = smul.addr %s213, 64
          %s218 = scalar_lea.hbm %s0, %s217
          %s219 = sshll.u32 %s212, 4
          %s220 = int_to_ptr.vmem [resolvable:$true] %s219
          %225 = dma.hbm_to_vmem [thread:$0]  %s218, 512, %s220, %s209, 64, 64, 4
        $region36: #{tpu_custom_call.1} parent=31 // pred_fallthru
          _
      $region32: #{tpu_custom_call.1} parent=5 // pred_fallthru
        _
      %p226 = scmp.le.s32.totalorder 1, %s18
      %p227 = scmp.lt.s32.totalorder %s18, 3
      %p228 = pnand %p226, %p227
      %p229 = pneg %p228
      // Predicated region
      $region37: #{tpu_custom_call.1} parent=5 // pred_check
        _
      $region38: #{tpu_custom_call.1} parent=5 // pred_check_branch
        %231 = sbr.rel (%p228) target = $region40
      $region39: #{tpu_custom_call.1} parent=5 // pred_region
        %s232 = ssub.s32 %s18, 1
        %s233 = sand.u32 %s31, 1
        %s234 = scalar_lea.sflag [#allocation3], %s233
        %s235 = sand.u32 %s31, 1
        %s236 = smul.addr %s235, 32
        %s237 = scalar_lea.vmem [#allocation2], %s236
        // Predicated region
        $region41: #{tpu_custom_call.1} parent=39 // pred_check
          %p238 = pneg %p44
        $region42: #{tpu_custom_call.1} parent=39 // pred_check_branch
          %240 = sbr.rel (%p238) target = $region44
        $region43: #{tpu_custom_call.1} parent=39 // pred_region
          %241 = dma.done %s234, 512
        $region44: #{tpu_custom_call.1} parent=39 // pred_fallthru
          _
        // Predicated region
        $region45: #{tpu_custom_call.1} parent=39 // pred_check
          %p242 = pneg %p65
        $region46: #{tpu_custom_call.1} parent=39 // pred_check_branch
          %244 = sbr.rel (%p242) target = $region48
        $region47: #{tpu_custom_call.1} parent=39 // pred_region
          %245 = dma.done [#allocation6], 1024
        $region48: #{tpu_custom_call.1} parent=39 // pred_fallthru
          _
        // Predicated region
        $region49: #{tpu_custom_call.1} parent=39 // pred_check
          %p246 = pneg %p107
        $region50: #{tpu_custom_call.1} parent=39 // pred_check_branch
          %248 = sbr.rel (%p246) target = $region52
        $region51: #{tpu_custom_call.1} parent=39 // pred_region
          %249 = dma.done [#allocation6], 1024
        $region52: #{tpu_custom_call.1} parent=39 // pred_fallthru
          _
        %s250 = sand.u32 %s31, 1
        %s251 = scalar_lea.sflag [#allocation3], %s250
        %s252 = sand.u32 %s31, 1
        %s253 = smul.addr %s252, 32
        %s254 = scalar_lea.vmem [#allocation2], %s253
        %p255 = pneg %p44
        %p256 = pneg %p41
        %p257 = pneg %p65
        %p258 = pneg %p62
        %p259 = pneg %p86
        %p260 = pneg %p83
        %p261 = pneg %p107
        %p262 = pneg %p104
        %p263 = pneg %p128
        %p264 = pneg %p125
        %p265 = pneg %p154
        %p266 = pneg %p151
        %s267 = sand.u32 %s141, 1
        %s268 = scalar_lea.sflag [#allocation4], %s267
        %s269 = sand.u32 %s141, 1
        %s270 = smul.addr %s269, 32
        %s271 = scalar_lea.vmem [#allocation8], %s270
        %s272 = smul.u32 8, %s23
        %s273 = smul.u32 8, %s23
        %v275 = vld [vmem:[%s237] sm:$0xf]
        %v276 = vld [vmem:[%s237 + $0x4] sm:$0xf]
        %v277 = vld [vmem:[%s237 + $0x8] sm:$0xf]
        %v278 = vld [vmem:[%s237 + $0xc] sm:$0xf]
        %v279 = vld [vmem:[%s237 + $0x10] sm:$0xf]
        %v280 = vld [vmem:[%s237 + $0x14] sm:$0xf]
        %v281 = vld [vmem:[%s237 + $0x18] sm:$0xf]
        %v282 = vld [vmem:[%s237 + $0x1c] sm:$0xf]
        %v283 = vld [vmem:[#allocation5] sm:$0xf]
        %v284 = vld [vmem:[#allocation5 + $0x4] sm:$0xf]
        %v285 = vld [vmem:[#allocation5 + $0x8] sm:$0xf]
        %v286 = vld [vmem:[#allocation5 + $0xc] sm:$0xf]
        %v287 = vld [vmem:[#allocation5 + $0x10] sm:$0xf]
        %v288 = vld [vmem:[#allocation5 + $0x14] sm:$0xf]
        %v289 = vld [vmem:[#allocation5 + $0x18] sm:$0xf]
        %v290 = vld [vmem:[#allocation5 + $0x1c] sm:$0xf]
        %v291 = vld [vmem:[#allocation5 + $0x20] sm:$0xf]
        %v292 = vld [vmem:[#allocation5 + $0x24] sm:$0xf]
        %v293 = vld [vmem:[#allocation5 + $0x28] sm:$0xf]
        %v294 = vld [vmem:[#allocation5 + $0x2c] sm:$0xf]
        %v295 = vld [vmem:[#allocation5 + $0x30] sm:$0xf]
        %v296 = vld [vmem:[#allocation5 + $0x34] sm:$0xf]
        %v297 = vld [vmem:[#allocation5 + $0x38] sm:$0xf]
        %v298 = vld [vmem:[#allocation5 + $0x3c] sm:$0xf]
        %v299 = vld [vmem:[%s2] sm:$0x1]
        %v301 = vlaneseq
        %v302 = vshrl.u32 %v301, 7
        %v303 = vsub.s32 0, %v302
        %v304 = vrot.slane %v299, %v303
        %v314 = vunpack.c.l.b16 %v275
        %v315 = vunpack.c.l.b16 %v276
        %v316 = vunpack.c.l.b16 %v277
        %v317 = vunpack.c.l.b16 %v278
        %v318 = vunpack.c.l.b16 %v279
        %v319 = vunpack.c.l.b16 %v280
        %v320 = vunpack.c.l.b16 %v281
        %v321 = vunpack.c.l.b16 %v282
        %v322 = vpack.c.b16 %v315, %v314
        %v323 = vpack.c.b16 %v317, %v316
        %v324 = vpack.c.b16 %v319, %v318
        %v325 = vpack.c.b16 %v321, %v320
        %v346 = vunpack.c.l.b16 %v283
        %v347 = vunpack.c.l.b16 %v284
        %v348 = vunpack.c.l.b16 %v285
        %v349 = vunpack.c.l.b16 %v286
        %v350 = vunpack.c.l.b16 %v287
        %v351 = vunpack.c.l.b16 %v288
        %v352 = vunpack.c.l.b16 %v289
        %v353 = vunpack.c.l.b16 %v290
        %v354 = vunpack.c.l.b16 %v291
        %v355 = vunpack.c.l.b16 %v292
        %v356 = vunpack.c.l.b16 %v293
        %v357 = vunpack.c.l.b16 %v294
        %v358 = vunpack.c.l.b16 %v295
        %v359 = vunpack.c.l.b16 %v296
        %v360 = vunpack.c.l.b16 %v297
        %v361 = vunpack.c.l.b16 %v298
        %v362 = vpack.c.b16 %v347, %v346
        %v363 = vpack.c.b16 %v349, %v348
        %v364 = vpack.c.b16 %v351, %v350
        %v365 = vpack.c.b16 %v353, %v352
        %v366 = vpack.c.b16 %v355, %v354
        %v367 = vpack.c.b16 %v357, %v356
        %v368 = vpack.c.b16 %v359, %v358
        %v369 = vpack.c.b16 %v361, %v360
        %378 = vmatprep.subr.bf16.mxu0 0
        %379 = vmatpush1.bf16.msra.mxu0 %v362
        %380 = vmatprep.subr.bf16.mxu0 0
        %381 = vmatpush1.bf16.msra.mxu0 %v363
        %382 = vmatprep.subr.bf16.mxu0 0
        %383 = vmatpush1.bf16.msra.mxu0 %v364
        %384 = vmatprep.subr.bf16.mxu0 0
        %385 = vmatpush1.bf16.msra.mxu0 %v365
        %386 = vmatprep.subr.bf16.mxu0 0
        %387 = vmatpush1.bf16.msra.mxu0 %v366
        %388 = vmatprep.subr.bf16.mxu0 0
        %389 = vmatpush1.bf16.msra.mxu0 %v367
        %390 = vmatprep.subr.bf16.mxu0 0
        %391 = vmatpush1.bf16.msra.mxu0 %v368
        %392 = vmatprep.subr.bf16.mxu0 0
        %393 = vmatpush1.bf16.msra.mxu0 %v369
        %394 = vmatprep.subr.bf16.mxu0 0
        %395 = vmatpush1.bf16.msra.mxu0 0
        %396 = vmatprep.subr.bf16.mxu0 0
        %397 = vmatpush1.bf16.msra.mxu0 0
        %398 = vmatprep.subr.bf16.mxu0 0
        %399 = vmatpush1.bf16.msra.mxu0 0
        %400 = vmatprep.subr.bf16.mxu0 0
        %401 = vmatpush1.bf16.msra.mxu0 0
        %402 = vmatprep.subr.bf16.mxu0 0
        %403 = vmatpush1.bf16.msra.mxu0 0
        %404 = vmatprep.subr.bf16.mxu0 0
        %405 = vmatpush1.bf16.msra.mxu0 0
        %406 = vmatprep.subr.bf16.mxu0 0
        %407 = vmatpush1.bf16.msra.mxu0 0
        %408 = vmatprep.subr.bf16.mxu0 0
        %409 = vmatpush1.bf16.msra.mxu0 0
        %410 = vmatprep.mubr.bf16.mxu0 0
        %411 = vmatmul.mubr.bf16.gmra.mrb[0].mxu0 %v322
        %v412 = vpop.f32.mrb[0].mxu0
        %v413 = vadd.f32 %v304, %v412
        %v414 = vpop.f32.mrb[0].mxu0
        %v415 = vpop.f32.mrb[0].mxu0
        %v416 = vadd.f32 %v304, %v415
        %v417 = vpop.f32.mrb[0].mxu0
        %418 = vmatprep.mubr.bf16.mxu0 0
        %419 = vmatmul.mubr.bf16.gmra.mrb[0].mxu0 %v323
        %v420 = vpop.f32.mrb[0].mxu0
        %v421 = vadd.f32 %v304, %v420
        %v422 = vpop.f32.mrb[0].mxu0
        %v423 = vpop.f32.mrb[0].mxu0
        %v424 = vadd.f32 %v304, %v423
        %v425 = vpop.f32.mrb[0].mxu0
        %426 = vmatprep.mubr.bf16.mxu0 0
        %427 = vmatmul.mubr.bf16.gmra.mrb[0].mxu0 %v324
        %v428 = vpop.f32.mrb[0].mxu0
        %v429 = vadd.f32 %v304, %v428
        %v430 = vpop.f32.mrb[0].mxu0
        %v431 = vpop.f32.mrb[0].mxu0
        %v432 = vadd.f32 %v304, %v431
        %v433 = vpop.f32.mrb[0].mxu0
        %434 = vmatprep.mubr.bf16.mxu0 0
        %435 = vmatmul.mubr.bf16.gmra.mrb[0].mxu0 %v325
        %v436 = vpop.f32.mrb[0].mxu0
        %v437 = vadd.f32 %v304, %v436
        %v438 = vpop.f32.mrb[0].mxu0
        %v439 = vpop.f32.mrb[0].mxu0
        %v440 = vadd.f32 %v304, %v439
        %v441 = vpop.f32.mrb[0].mxu0
        %442 = vdwg.mxu0
        %v443 = vand.u32 2147483647, %v413
        %v444 = vand.u32 2147483647, %v416
        %v445 = vand.u32 2147483647, %v421
        %v446 = vand.u32 2147483647, %v424
        %v447 = vand.u32 2147483647, %v429
        %v448 = vand.u32 2147483647, %v432
        %v449 = vand.u32 2147483647, %v437
        %v450 = vand.u32 2147483647, %v440
        %v451 = vsub.f32 0.0, %v443
        %v452 = vsub.f32 0.0, %v444
        %v453 = vsub.f32 0.0, %v445
        %v454 = vsub.f32 0.0, %v446
        %v455 = vsub.f32 0.0, %v447
        %v456 = vsub.f32 0.0, %v448
        %v457 = vsub.f32 0.0, %v449
        %v458 = vsub.f32 0.0, %v450
        %v459 = vmul.f32 %v451, 1.442695
        %v460 = vpow.pop %v459
        %v461 = vmul.f32 %v452, 1.442695
        %v462 = vpow.pop %v461
        %v463 = vmul.f32 %v453, 1.442695
        %v464 = vpow.pop %v463
        %v465 = vmul.f32 %v454, 1.442695
        %v466 = vpow.pop %v465
        %v467 = vmul.f32 %v455, 1.442695
        %v468 = vpow.pop %v467
        %v469 = vmul.f32 %v456, 1.442695
        %v470 = vpow.pop %v469
        %v471 = vmul.f32 %v457, 1.442695
        %v472 = vpow.pop %v471
        %v473 = vmul.f32 %v458, 1.442695
        %v474 = vpow.pop %v473
        %v475 = vadd.f32 %v460, 1.0
        %v476 = vadd.f32 %v462, 1.0
        %v477 = vadd.f32 %v464, 1.0
        %v478 = vadd.f32 %v466, 1.0
        %v479 = vadd.f32 %v468, 1.0
        %v480 = vadd.f32 %v470, 1.0
        %v481 = vadd.f32 %v472, 1.0
        %v482 = vadd.f32 %v474, 1.0
        %v483 = vrcp.pop %v475
        %v484 = vrcp.pop %v476
        %v485 = vrcp.pop %v477
        %v486 = vrcp.pop %v478
        %v487 = vrcp.pop %v479
        %v488 = vrcp.pop %v480
        %v489 = vrcp.pop %v481
        %v490 = vrcp.pop %v482
        %vm491 = vcmp.ge.f32.partialorder %v413, 0.0
        %vm492 = vcmp.ge.f32.partialorder %v416, 0.0
        %vm493 = vcmp.ge.f32.partialorder %v421, 0.0
        %vm494 = vcmp.ge.f32.partialorder %v424, 0.0
        %vm495 = vcmp.ge.f32.partialorder %v429, 0.0
        %vm496 = vcmp.ge.f32.partialorder %v432, 0.0
        %vm497 = vcmp.ge.f32.partialorder %v437, 0.0
        %vm498 = vcmp.ge.f32.partialorder %v440, 0.0
        %v499 = vmul.f32 %v460, %v483
        %v500 = vmul.f32 %v462, %v484
        %v501 = vmul.f32 %v464, %v485
        %v502 = vmul.f32 %v466, %v486
        %v503 = vmul.f32 %v468, %v487
        %v504 = vmul.f32 %v470, %v488
        %v505 = vmul.f32 %v472, %v489
        %v506 = vmul.f32 %v474, %v490
        %v507 = vsel %vm491, %v483, %v499
        %v508 = vsel %vm492, %v484, %v500
        %v509 = vsel %vm493, %v485, %v501
        %v510 = vsel %vm494, %v486, %v502
        %v511 = vsel %vm495, %v487, %v503
        %v512 = vsel %vm496, %v488, %v504
        %v513 = vsel %vm497, %v489, %v505
        %v514 = vsel %vm498, %v490, %v506
        %v515 = vpack.c.bf16 %v508, %v507
        %v516 = vpack.c.bf16 %v510, %v509
        %v517 = vpack.c.bf16 %v512, %v511
        %v518 = vpack.c.bf16 %v514, %v513
        %v519 = vld [vmem:[#allocation7] sm:$0xf]
        %v520 = vld [vmem:[#allocation7 + $0x4] sm:$0xf]
        %v521 = vld [vmem:[#allocation7 + $0x8] sm:$0xf]
        %v522 = vld [vmem:[#allocation7 + $0xc] sm:$0xf]
        %v523 = vld [vmem:[#allocation7 + $0x10] sm:$0xf]
        %v524 = vld [vmem:[#allocation7 + $0x14] sm:$0xf]
        %v525 = vld [vmem:[#allocation7 + $0x18] sm:$0xf]
        %v526 = vld [vmem:[#allocation7 + $0x1c] sm:$0xf]
        %v527 = vld [vmem:[#allocation7 + $0x20] sm:$0xf]
        %v528 = vld [vmem:[#allocation7 + $0x24] sm:$0xf]
        %v529 = vld [vmem:[#allocation7 + $0x28] sm:$0xf]
        %v530 = vld [vmem:[#allocation7 + $0x2c] sm:$0xf]
        %v531 = vld [vmem:[#allocation7 + $0x30] sm:$0xf]
        %v532 = vld [vmem:[#allocation7 + $0x34] sm:$0xf]
        %v533 = vld [vmem:[#allocation7 + $0x38] sm:$0xf]
        %v534 = vld [vmem:[#allocation7 + $0x3c] sm:$0xf]
        %v535 = vld [vmem:[%s4] sm:$0x1]
        %v537 = vlaneseq
        %v538 = vshrl.u32 %v537, 7
        %v539 = vsub.s32 0, %v538
        %v540 = vrot.slane %v535, %v539
        %v558 = vunpack.c.l.b16 %v519
        %v559 = vunpack.c.l.b16 %v520
        %v560 = vunpack.c.l.b16 %v521
        %v561 = vunpack.c.l.b16 %v522
        %v562 = vunpack.c.l.b16 %v523
        %v563 = vunpack.c.l.b16 %v524
        %v564 = vunpack.c.l.b16 %v525
        %v565 = vunpack.c.l.b16 %v526
        %v566 = vunpack.c.l.b16 %v527
        %v567 = vunpack.c.l.b16 %v528
        %v568 = vunpack.c.l.b16 %v529
        %v569 = vunpack.c.l.b16 %v530
        %v570 = vunpack.c.l.b16 %v531
        %v571 = vunpack.c.l.b16 %v532
        %v572 = vunpack.c.l.b16 %v533
        %v573 = vunpack.c.l.b16 %v534
        %v574 = vpack.c.b16 %v559, %v558
        %v575 = vpack.c.b16 %v561, %v560
        %v576 = vpack.c.b16 %v563, %v562
        %v577 = vpack.c.b16 %v565, %v564
        %v578 = vpack.c.b16 %v567, %v566
        %v579 = vpack.c.b16 %v569, %v568
        %v580 = vpack.c.b16 %v571, %v570
        %v581 = vpack.c.b16 %v573, %v572
        %590 = vmatprep.subr.bf16.mxu0 0
        %591 = vmatpush1.bf16.msra.mxu0 %v574
        %592 = vmatprep.subr.bf16.mxu0 0
        %593 = vmatpush1.bf16.msra.mxu0 %v575
        %594 = vmatprep.subr.bf16.mxu0 0
        %595 = vmatpush1.bf16.msra.mxu0 %v576
        %596 = vmatprep.subr.bf16.mxu0 0
        %597 = vmatpush1.bf16.msra.mxu0 %v577
        %598 = vmatprep.subr.bf16.mxu0 0
        %599 = vmatpush1.bf16.msra.mxu0 %v578
        %600 = vmatprep.subr.bf16.mxu0 0
        %601 = vmatpush1.bf16.msra.mxu0 %v579
        %602 = vmatprep.subr.bf16.mxu0 0
        %603 = vmatpush1.bf16.msra.mxu0 %v580
        %604 = vmatprep.subr.bf16.mxu0 0
        %605 = vmatpush1.bf16.msra.mxu0 %v581
        %606 = vmatprep.subr.bf16.mxu0 0
        %607 = vmatpush1.bf16.msra.mxu0 0
        %608 = vmatprep.subr.bf16.mxu0 0
        %609 = vmatpush1.bf16.msra.mxu0 0
        %610 = vmatprep.subr.bf16.mxu0 0
        %611 = vmatpush1.bf16.msra.mxu0 0
        %612 = vmatprep.subr.bf16.mxu0 0
        %613 = vmatpush1.bf16.msra.mxu0 0
        %614 = vmatprep.subr.bf16.mxu0 0
        %615 = vmatpush1.bf16.msra.mxu0 0
        %616 = vmatprep.subr.bf16.mxu0 0
        %617 = vmatpush1.bf16.msra.mxu0 0
        %618 = vmatprep.subr.bf16.mxu0 0
        %619 = vmatpush1.bf16.msra.mxu0 0
        %620 = vmatprep.subr.bf16.mxu0 0
        %621 = vmatpush1.bf16.msra.mxu0 0
        %622 = vmatprep.mubr.bf16.mxu0 0
        %623 = vmatmul.mubr.bf16.gmra.mrb[0].mxu0 %v515
        %v624 = vpop.f32.mrb[0].mxu0
        %v625 = vadd.f32 %v540, %v624
        %v626 = vpop.f32.mrb[0].mxu0
        %v627 = vpop.f32.mrb[0].mxu0
        %v628 = vadd.f32 %v540, %v627
        %v629 = vpop.f32.mrb[0].mxu0
        %630 = vmatprep.mubr.bf16.mxu0 0
        %631 = vmatmul.mubr.bf16.gmra.mrb[0].mxu0 %v516
        %v632 = vpop.f32.mrb[0].mxu0
        %v633 = vadd.f32 %v540, %v632
        %v634 = vpop.f32.mrb[0].mxu0
        %v635 = vpop.f32.mrb[0].mxu0
        %v636 = vadd.f32 %v540, %v635
        %v637 = vpop.f32.mrb[0].mxu0
        %638 = vmatprep.mubr.bf16.mxu0 0
        %639 = vmatmul.mubr.bf16.gmra.mrb[0].mxu0 %v517
        %v640 = vpop.f32.mrb[0].mxu0
        %v641 = vadd.f32 %v540, %v640
        %v642 = vpop.f32.mrb[0].mxu0
        %v643 = vpop.f32.mrb[0].mxu0
        %v644 = vadd.f32 %v540, %v643
        %v645 = vpop.f32.mrb[0].mxu0
        %646 = vmatprep.mubr.bf16.mxu0 0
        %647 = vmatmul.mubr.bf16.gmra.mrb[0].mxu0 %v518
        %v648 = vpop.f32.mrb[0].mxu0
        %v649 = vadd.f32 %v540, %v648
        %v650 = vpop.f32.mrb[0].mxu0
        %v651 = vpop.f32.mrb[0].mxu0
        %v652 = vadd.f32 %v540, %v651
        %v653 = vpop.f32.mrb[0].mxu0
        %654 = vdwg.mxu0
        %v655 = vand.u32 2147483647, %v625
        %v656 = vand.u32 2147483647, %v628
        %v657 = vand.u32 2147483647, %v633
        %v658 = vand.u32 2147483647, %v636
        %v659 = vand.u32 2147483647, %v641
        %v660 = vand.u32 2147483647, %v644
        %v661 = vand.u32 2147483647, %v649
        %v662 = vand.u32 2147483647, %v652
        %v663 = vsub.f32 0.0, %v655
        %v664 = vsub.f32 0.0, %v656
        %v665 = vsub.f32 0.0, %v657
        %v666 = vsub.f32 0.0, %v658
        %v667 = vsub.f32 0.0, %v659
        %v668 = vsub.f32 0.0, %v660
        %v669 = vsub.f32 0.0, %v661
        %v670 = vsub.f32 0.0, %v662
        %v671 = vmul.f32 %v663, 1.442695
        %v672 = vpow.pop %v671
        %v673 = vmul.f32 %v664, 1.442695
        %v674 = vpow.pop %v673
        %v675 = vmul.f32 %v665, 1.442695
        %v676 = vpow.pop %v675
        %v677 = vmul.f32 %v666, 1.442695
        %v678 = vpow.pop %v677
        %v679 = vmul.f32 %v667, 1.442695
        %v680 = vpow.pop %v679
        %v681 = vmul.f32 %v668, 1.442695
        %v682 = vpow.pop %v681
        %v683 = vmul.f32 %v669, 1.442695
        %v684 = vpow.pop %v683
        %v685 = vmul.f32 %v670, 1.442695
        %v686 = vpow.pop %v685
        %v687 = vadd.f32 %v672, 1.0
        %v688 = vadd.f32 %v674, 1.0
        %v689 = vadd.f32 %v676, 1.0
        %v690 = vadd.f32 %v678, 1.0
        %v691 = vadd.f32 %v680, 1.0
        %v692 = vadd.f32 %v682, 1.0
        %v693 = vadd.f32 %v684, 1.0
        %v694 = vadd.f32 %v686, 1.0
        %v695 = vrcp.pop %v687
        %v696 = vrcp.pop %v688
        %v697 = vrcp.pop %v689
        %v698 = vrcp.pop %v690
        %v699 = vrcp.pop %v691
        %v700 = vrcp.pop %v692
        %v701 = vrcp.pop %v693
        %v702 = vrcp.pop %v694
        %vm703 = vcmp.ge.f32.partialorder %v625, 0.0
        %vm704 = vcmp.ge.f32.partialorder %v628, 0.0
        %vm705 = vcmp.ge.f32.partialorder %v633, 0.0
        %vm706 = vcmp.ge.f32.partialorder %v636, 0.0
        %vm707 = vcmp.ge.f32.partialorder %v641, 0.0
        %vm708 = vcmp.ge.f32.partialorder %v644, 0.0
        %vm709 = vcmp.ge.f32.partialorder %v649, 0.0
        %vm710 = vcmp.ge.f32.partialorder %v652, 0.0
        %v711 = vmul.f32 %v672, %v695
        %v712 = vmul.f32 %v674, %v696
        %v713 = vmul.f32 %v676, %v697
        %v714 = vmul.f32 %v678, %v698
        %v715 = vmul.f32 %v680, %v699
        %v716 = vmul.f32 %v682, %v700
        %v717 = vmul.f32 %v684, %v701
        %v718 = vmul.f32 %v686, %v702
        %v719 = vsel %vm703, %v695, %v711
        %v720 = vsel %vm704, %v696, %v712
        %v721 = vsel %vm705, %v697, %v713
        %v722 = vsel %vm706, %v698, %v714
        %v723 = vsel %vm707, %v699, %v715
        %v724 = vsel %vm708, %v700, %v716
        %v725 = vsel %vm709, %v701, %v717
        %v726 = vsel %vm710, %v702, %v718
        %v727 = vpack.c.bf16 %v720, %v719
        %v728 = vpack.c.bf16 %v722, %v721
        %v729 = vpack.c.bf16 %v724, %v723
        %v730 = vpack.c.bf16 %v726, %v725
        %v735 = vunpack.c.l.b16 %v727
        %v736 = vunpack.c.h.b16 %v727
        %v737 = vunpack.c.l.b16 %v728
        %v738 = vunpack.c.h.b16 %v728
        %v739 = vunpack.c.l.b16 %v729
        %v740 = vunpack.c.h.b16 %v729
        %v741 = vunpack.c.l.b16 %v730
        %v742 = vunpack.c.h.b16 %v730
        %v743 = vpack.c.b16 %v735, %v735
        %v744 = vpack.c.b16 %v736, %v736
        %v745 = vpack.c.b16 %v737, %v737
        %v746 = vpack.c.b16 %v738, %v738
        %v747 = vpack.c.b16 %v739, %v739
        %v748 = vpack.c.b16 %v740, %v740
        %v749 = vpack.c.b16 %v741, %v741
        %v750 = vpack.c.b16 %v742, %v742
        %759 = vst [vmem:[%s271] sm:$0xf] %v743
        %760 = vst [vmem:[%s271 + $0x4] sm:$0xf] %v744
        %761 = vst [vmem:[%s271 + $0x8] sm:$0xf] %v745
        %762 = vst [vmem:[%s271 + $0xc] sm:$0xf] %v746
        %763 = vst [vmem:[%s271 + $0x10] sm:$0xf] %v747
        %764 = vst [vmem:[%s271 + $0x14] sm:$0xf] %v748
        %765 = vst [vmem:[%s271 + $0x18] sm:$0xf] %v749
        %766 = vst [vmem:[%s271 + $0x1c] sm:$0xf] %v750
        %s767 = sand.u32 %s141, 1
        %s768 = scalar_lea.sflag [#allocation4], %s767
        %s769 = sand.u32 %s141, 1
        %s770 = smul.addr %s769, 32
        %s771 = scalar_lea.vmem [#allocation8], %s770
        // Predicated region
        $region53: #{tpu_custom_call.1} parent=39 // pred_check
          %p772 = pneg %p151
        $region54: #{tpu_custom_call.1} parent=39 // pred_check_branch
          %774 = sbr.rel (%p772) target = $region56
        $region55: #{tpu_custom_call.1} parent=39 // pred_region
          %s775 = smul.u32 8, %s23
          %s777 = ssub.s32 512, 512
          %778 = vsyncadd %s768, %s777
          %s779 = smul.addr %s775, 64
          %s780 = scalar_lea.hbm %s5, %s779
          %s781 = sshll.u32 %s771, 4
          %s782 = int_to_ptr.vmem [resolvable:$true] %s781
          %787 = dma.vmem_to_hbm [thread:$0]  %s782, 512, %s780, %s768, 64, 64, 4
        $region56: #{tpu_custom_call.1} parent=39 // pred_fallthru
          _
      $region40: #{tpu_custom_call.1} parent=5 // pred_fallthru
        _
      %p788 = scmp.le.s32.totalorder 2, %s18
      // Predicated region
      $region57: #{tpu_custom_call.1} parent=5 // pred_check
        %p789 = pneg %p788
      $region58: #{tpu_custom_call.1} parent=5 // pred_check_branch
        %791 = sbr.rel (%p789) target = $region60
      $region59: #{tpu_custom_call.1} parent=5 // pred_region
        %s792 = ssub.s32 %s18, 2
        // Predicated region
        $region61: #{tpu_custom_call.1} parent=59 // pred_check
          %p793 = pneg %p157
        $region62: #{tpu_custom_call.1} parent=59 // pred_check_branch
          %795 = sbr.rel (%p793) target = $region64
        $region63: #{tpu_custom_call.1} parent=59 // pred_region
          %s796 = sand.u32 %s142, 1
          %s797 = scalar_lea.sflag [#allocation4], %s796
          %s798 = sand.u32 %s142, 1
          %s799 = smul.addr %s798, 32
          %s800 = scalar_lea.vmem [#allocation8], %s799
          %801 = dma.done %s797, 512
        $region64: #{tpu_custom_call.1} parent=59 // pred_fallthru
          _
      $region60: #{tpu_custom_call.1} parent=5 // pred_fallthru
        _
    $region6: #{tpu_custom_call.1} parent=1 // loop_footer
      %s22 = sadd.s32 1, %s18
    $region7: #{tpu_custom_call.1} parent=1 // loop_footer_branch
      %17 = sbr.rel target = $region3
    $region8: #{tpu_custom_call.1} parent=1 // loop_exit
      _
    %802 = vsyncpa [#allocation3], 1
    %s803 = scalar_lea.sflag [#allocation3], 1
    %804 = vsyncpa %s803, 1
    %805 = vsyncpa [#allocation6], 1
    %806 = vsyncpa [#allocation4], 1
    %s807 = scalar_lea.sflag [#allocation4], 1
    %808 = vsyncpa %s807, 1

</llo_original>
